<compile_context>
chip_gen: v7x
topology: tpu7x:2x2x1
jax: 0.10.0
libtpu: 0.0.40
codegen_flags: <defaults>
</compile_context>

<pallas_src>
import jax
import jax.numpy as jnp
from jax.experimental import pallas as pl
from jax.experimental.pallas import tpu as pltpu


def _conv_relu_kernel(p_ref, w_ref, b_ref, o_ref):
    # p_ref: (K, TILE_M) bf16 transposed patches
    # w_ref: (Cout, K)   bf16 weights (resident across grid steps)
    # b_ref: (Cout, 1)   f32 bias
    # o_ref: (Cout, TILE_M) f32 output (lane-dense last dim)
    acc = jnp.dot(w_ref[...], p_ref[...], preferred_element_type=jnp.float32)
    acc = acc + b_ref[...]                    # broadcast bias over lane (M) axis
    o_ref[...] = jnp.maximum(acc, 0.0).astype(o_ref.dtype)


def down_bn_conv(x, weight, bias, *, tile_m=8192):
    """x: (N, Cin, H, W) f32; weight: (Cout, Cin, 2, 2); bias: (Cout,).
    Returns (N, Cout, H//2, W//2) == relu(Conv2d(k=2, s=2, p=0)(x))."""
    N, C, H, W = x.shape
    Cout = weight.shape[0]
    OH, OW = H // 2, W // 2
    K = C * 4
    M = N * OH * OW

    # Non-overlapping 2x2 patches, transposed -> (K, M); K ordered (c, kh, kw)
    # to match weight.reshape(Cout, C*4), M ordered (n, oh, ow).
    patches_t = (
        x.reshape(N, C, OH, 2, OW, 2)
         .transpose(1, 3, 5, 0, 2, 4)          # (C, 2, 2, N, OH, OW)
         .reshape(K, M)
         .astype(jnp.bfloat16)                 # halve input HBM traffic
    )
    wmat = weight.reshape(Cout, K).astype(jnp.bfloat16)   # (Cout, K)
    bmat = bias.reshape(Cout, 1).astype(jnp.float32)      # (Cout, 1)

    # tile_m default (8192) is a multiple of 128; if the problem is smaller,
    # a single full-extent block (block dim == array dim) is always legal.
    tile_m = min(tile_m, M)
    grid = (pl.cdiv(M, tile_m),)

    cost = pl.CostEstimate(
        flops=2 * M * K * Cout,
        transcendentals=0,
        bytes_accessed=M * K * 2 + Cout * K * 2 + Cout * 4 + M * Cout * 4,
    )

    out_t = pl.pallas_call(
        _conv_relu_kernel,
        out_shape=jax.ShapeDtypeStruct((Cout, M), x.dtype),
        grid=grid,
        in_specs=[
            pl.BlockSpec((K, tile_m), lambda i: (0, i)),     # patches tile
            pl.BlockSpec((Cout, K), lambda i: (0, 0)),       # weights, resident
            pl.BlockSpec((Cout, 1), lambda i: (0, 0)),       # bias, resident
        ],
        out_specs=pl.BlockSpec((Cout, tile_m), lambda i: (0, i)),
        compiler_params=pltpu.CompilerParams(
            dimension_semantics=("parallel",),               # v7x: 2 TCs
            allow_input_fusion=[True, False, False],         # fuse patch transpose
        ),
        cost_estimate=cost,
    )(patches_t, wmat, bmat)

    # (Cout, M) -> (N, Cout, OH, OW): only a leading-axis swap remains.
    return out_t.reshape(Cout, N, OH, OW).transpose(1, 0, 2, 3)


if __name__ == "__main__":
    key = jax.random.PRNGKey(0)
    kx, kw, kb = jax.random.split(key, 3)

    N, Cin, H, W = 2, 4, 16, 16
    Cout, ksz = 8, 2

    x = jax.random.normal(kx, (N, Cin, H, W), dtype=jnp.float32)

    # Deterministic Conv2d-style init: U(-1/sqrt(fan_in), 1/sqrt(fan_in))
    fan_in = Cin * ksz * ksz
    bound = 1.0 / (fan_in ** 0.5)
    weight = jax.random.uniform(kw, (Cout, Cin, ksz, ksz),
                                minval=-bound, maxval=bound, dtype=jnp.float32)
    bias = jax.random.uniform(kb, (Cout,),
                              minval=-bound, maxval=bound, dtype=jnp.float32)

    y = jax.jit(down_bn_conv)(x, weight, bias)
    y = jax.block_until_ready(y)

    # Reference: same bf16-rounded multiply inputs, f32 accumulation,
    # matching nn.Conv2d(k=2, s=2, p=0) + relu semantics.
    xb = x.astype(jnp.bfloat16).astype(jnp.float32)
    wb = weight.astype(jnp.bfloat16).astype(jnp.float32)
    ref = jax.lax.conv_general_dilated(
        xb, wb, window_strides=(2, 2), padding="VALID",
        dimension_numbers=("NCHW", "OIHW", "NCHW"))
    ref = jnp.maximum(ref + bias.reshape(1, Cout, 1, 1), 0.0)

    assert y.shape == (N, Cout, H // 2, W // 2)
    assert jnp.allclose(y, ref, atol=1e-4, rtol=1e-4)

    print("KERNEL_OK")
</pallas_src>

<mosaic_0001>
module attributes {stable_mosaic.version = 11 : i64} {
  func.func @_conv_relu_kernel(%arg0: i32, %arg1: memref<16x128xbf16, #tpu.memory_space<vmem>>, %arg2: memref<8x16xbf16, #tpu.memory_space<vmem>>, %arg3: memref<8x1xf32, #tpu.memory_space<vmem>>, %arg4: memref<8x128xf32, #tpu.memory_space<vmem>>) attributes {dimension_semantics = [#tpu.dimension_semantics<parallel>], iteration_bounds = array<i64: 1>, scalar_prefetch = 0 : i64, scratch_operands = 0 : i64, tpu.core_type = #tpu.core_type<tc>, window_params = [{transform_indices = @transform_0, window_bounds = array<i64: 16, 128>}, {pipeline_mode = #tpu.pipeline_mode<synchronous>, transform_indices = @transform_1, window_bounds = array<i64: 8, 16>}, {pipeline_mode = #tpu.pipeline_mode<synchronous>, transform_indices = @transform_2, window_bounds = array<i64: 8, 1>}, {transform_indices = @transform_3, window_bounds = array<i64: 8, 128>}]} {
    %c0 = arith.constant 0 : index
    %c0_0 = arith.constant 0 : index
    %0 = vector.load %arg2[%c0, %c0_0] : memref<8x16xbf16, #tpu.memory_space<vmem>>, vector<8x16xbf16>
    %c0_1 = arith.constant 0 : index
    %c0_2 = arith.constant 0 : index
    %1 = vector.load %arg1[%c0_1, %c0_2] : memref<16x128xbf16, #tpu.memory_space<vmem>>, vector<16x128xbf16>
    %cst = arith.constant dense<0.000000e+00> : vector<8x128xf32>
    %2 = tpu.matmul %0, %1, %cst {dimension_numbers = #tpu.dot_dimension_numbers<[1], [0], [0], [1], [0, 0, 1, 1], [], []>} : vector<8x16xbf16>, vector<16x128xbf16>, vector<8x128xf32> -> vector<8x128xf32>
    %c0_3 = arith.constant 0 : index
    %c0_4 = arith.constant 0 : index
    %3 = vector.load %arg3[%c0_3, %c0_4] : memref<8x1xf32, #tpu.memory_space<vmem>>, vector<8x1xf32>
    %4 = vector.broadcast %3 : vector<8x1xf32> to vector<8x128xf32>
    %5 = arith.addf %2, %4 : vector<8x128xf32>
    %cst_5 = arith.constant 0.000000e+00 : f32
    %6 = vector.broadcast %cst_5 : f32 to vector<8x128xf32>
    %7 = arith.maximumf %5, %6 : vector<8x128xf32>
    %c0_6 = arith.constant 0 : index
    %c0_7 = arith.constant 0 : index
    %8 = vector.load %arg4[%c0_6, %c0_7] : memref<8x128xf32, #tpu.memory_space<vmem>>, vector<8x128xf32>
    tpu.vector_store %arg4[%c0_6, %c0_7], %7 {strides = array<i32>} : memref<8x128xf32, #tpu.memory_space<vmem>>, vector<8x128xf32>,
    return
  }
  func.func @transform_0(%arg0: i32) -> (i32, i32) {
    %c0_i32 = arith.constant 0 : i32
    %c0_i32_0 = arith.constant 0 : i32
    return %c0_i32, %arg0 : i32, i32
  }
  func.func @transform_1(%arg0: i32) -> (i32, i32) {
    %c0_i32 = arith.constant 0 : i32
    %c0_i32_0 = arith.constant 0 : i32
    %c0_i32_1 = arith.constant 0 : i32
    return %c0_i32, %c0_i32_0 : i32, i32
  }
  func.func @transform_2(%arg0: i32) -> (i32, i32) {
    %c0_i32 = arith.constant 0 : i32
    %c0_i32_0 = arith.constant 0 : i32
    %c0_i32_1 = arith.constant 0 : i32
    return %c0_i32, %c0_i32_0 : i32, i32
  }
  func.func @transform_3(%arg0: i32) -> (i32, i32) {
    %c0_i32 = arith.constant 0 : i32
    %c0_i32_0 = arith.constant 0 : i32
    return %c0_i32, %arg0 : i32, i32
  }
}

</mosaic_0001>

<llo_original>
// kernel: down_bn_conv.1
$region0: #{down_bn_conv.1}
  #allocation0 [shape = 'u32[]', space=smem, size = 0x4, offset = 0x4, fixed_abs, tag = 'smem constant byte address 0x4 - core index']
  #allocation1 [shape = 'u32[144,128]{1,0:T(1,128)}', space=vmem, size = 0x12000, scoped, tag = 'internal scratch']
  %s0 = inlined_call_operand.vmem [shape: bf16[16,128], index: 0, kind: input, shape index: {}]
  %s1 = inlined_call_operand.vmem [shape: bf16[8,16], index: 1, kind: input, shape index: {}]
  %s2 = inlined_call_operand.vmem [shape: f32[8,1], index: 2, kind: input, shape index: {}]
  %s3 = inlined_call_operand.vmem [shape: f32[8,128], index: 3, kind: output, shape index: {}]
  %s4 = sld [smem:[#allocation0]]
  $region22: #{down_bn_conv.1} parent=0
    _
  %s6 = ssub.s32 1, %s4
  %s7 = scalar_select 0, %s6, %s4
  // Predicated region
  $region2: #{down_bn_conv.1} parent=0 // pred_check
    _
  $region3: #{down_bn_conv.1} parent=0 // pred_check_branch
    %9 = sbr.rel (0) target = $region5
  $region4: #{down_bn_conv.1} parent=0 // pred_region
    _
  $region5: #{down_bn_conv.1} parent=0 // pred_fallthru
    _
  // Predicated region
  $region6: #{down_bn_conv.1} parent=0 // pred_check
    _
  $region7: #{down_bn_conv.1} parent=0 // pred_check_branch
    %11 = sbr.rel (0) target = $region9
  $region8: #{down_bn_conv.1} parent=0 // pred_region
    _
  $region9: #{down_bn_conv.1} parent=0 // pred_fallthru
    _
  // Predicated region
  $region10: #{down_bn_conv.1} parent=0 // pred_check
    _
  $region11: #{down_bn_conv.1} parent=0 // pred_check_branch
    %13 = sbr.rel (0) target = $region13
  $region12: #{down_bn_conv.1} parent=0 // pred_region
    _
  $region13: #{down_bn_conv.1} parent=0 // pred_fallthru
    _
  %v15 = vld [vmem:[%s1] sm:$0xf]
  %v16 = vld [vmem:[%s0] sm:$0xf]
  %v17 = vld [vmem:[%s0 + $0x4] sm:$0xf]
  %v18 = vld [vmem:[%s2] sm:$0xff]
  %20 = vset.pattern.permute.xlu0 0
  %21 = vperm.xlu0 %20, %v18
  %v22 = vpop.permute.xlu0 %21
  %v26 = vunpack.c.l.b16 %v16
  %v27 = vunpack.c.l.b16 %v17
  %v28 = vpack.c.b16 %v27, %v26
  %vm30 = vcmask 130048
  %v32 = vsel %vm30, %v15, 0
  %34 = vmatprep.subr.bf16.mxu0 0
  %35 = vmatpush1.bf16.msra.mxu0 %v28
  %36 = vmatprep.subr.bf16.mxu0 0
  %37 = vmatpush1.bf16.msra.mxu0 0
  %38 = vmatprep.subr.bf16.mxu0 0
  %39 = vmatpush1.bf16.msra.mxu0 0
  %40 = vmatprep.subr.bf16.mxu0 0
  %41 = vmatpush1.bf16.msra.mxu0 0
  %42 = vmatprep.subr.bf16.mxu0 0
  %43 = vmatpush1.bf16.msra.mxu0 0
  %44 = vmatprep.subr.bf16.mxu0 0
  %45 = vmatpush1.bf16.msra.mxu0 0
  %46 = vmatprep.subr.bf16.mxu0 0
  %47 = vmatpush1.bf16.msra.mxu0 0
  %48 = vmatprep.subr.bf16.mxu0 0
  %49 = vmatpush1.bf16.msra.mxu0 0
  %50 = vmatprep.subr.bf16.mxu0 0
  %51 = vmatpush1.bf16.msra.mxu0 0
  %52 = vmatprep.subr.bf16.mxu0 0
  %53 = vmatpush1.bf16.msra.mxu0 0
  %54 = vmatprep.subr.bf16.mxu0 0
  %55 = vmatpush1.bf16.msra.mxu0 0
  %56 = vmatprep.subr.bf16.mxu0 0
  %57 = vmatpush1.bf16.msra.mxu0 0
  %58 = vmatprep.subr.bf16.mxu0 0
  %59 = vmatpush1.bf16.msra.mxu0 0
  %60 = vmatprep.subr.bf16.mxu0 0
  %61 = vmatpush1.bf16.msra.mxu0 0
  %62 = vmatprep.subr.bf16.mxu0 0
  %63 = vmatpush1.bf16.msra.mxu0 0
  %64 = vmatprep.subr.bf16.mxu0 0
  %65 = vmatpush1.bf16.msra.mxu0 0
  %66 = vmatprep.mubr.bf16.mxu0 0
  %67 = vmatmul.mubr.bf16.gmra.mrb[0].mxu0 %v32
  %v68 = vpop.f32.mrb[0].mxu0
  %v69 = vadd.f32 %v22, %v68
  %v70 = vpop.f32.mrb[0].mxu0
  %v71 = vpop.f32.mrb[0].mxu0
  %v72 = vpop.f32.mrb[0].mxu0
  %73 = vdwg.mxu0
  %v74 = vmax.f32 %v69, 0.0
  %75 = vst [vmem:[%s3] sm:$0xff] %v74
  // Predicated region
  $region14: #{down_bn_conv.1} parent=0 // pred_check
    _
  $region15: #{down_bn_conv.1} parent=0 // pred_check_branch
    %77 = sbr.rel (0) target = $region17
  $region16: #{down_bn_conv.1} parent=0 // pred_region
    _
  $region17: #{down_bn_conv.1} parent=0 // pred_fallthru
    _
  // Predicated region
  $region18: #{down_bn_conv.1} parent=0 // pred_check
    _
  $region19: #{down_bn_conv.1} parent=0 // pred_check_branch
    %79 = sbr.rel (0) target = $region21
  $region20: #{down_bn_conv.1} parent=0 // pred_region
    _
  $region21: #{down_bn_conv.1} parent=0 // pred_fallthru
    _

</llo_original>
